<compile_context>
chip_gen: v6e
topology: v6e:2x2x1
jax: 0.10.0
libtpu: 0.0.40
codegen_flags: <defaults>
</compile_context>

<pallas_src>
import functools
import math

import jax
import jax.numpy as jnp
from jax import lax
from jax.experimental import pallas as pl
from jax.experimental.pallas import tpu as pltpu


_VMEM_CAP = 64 * 1024 * 1024  # never request more scoped VMEM than v7x physical


def _round_up(x, n):
    return ((x + n - 1) // n) * n


def _int8_mxu_supported():
    """int8 x int8 -> int32 MXU exists on v4/v5/v6; v7x has no integer MXU.

    NOTE: inspects the default backend at trace time.  When AOT-compiling for a
    different target, pass `use_int8_mxu=` to `w8a8_linear_aiu` explicitly.
    """
    try:
        kind = jax.devices()[0].device_kind.lower()
    except Exception:
        return False
    return any(tag in kind for tag in ("v4", "v5", "v6"))


# ----------------------------------------------------------------------------
# Weight preparation (hoist out of the per-call path; cache at load time)
# ----------------------------------------------------------------------------
def _choose_weight_blocks(out_features, in_features):
    """block_n / block_k chosen from the weight shape only, so the prepared
    (transposed + padded) weight can be cached and reused across calls."""
    bn = min(2048, _round_up(out_features, 256))
    bk = min(2048, _round_up(in_features, 256))

    # Keep kernel B's double-buffered footprint <= ~14 MiB assuming block_m<=512
    # (int8 operands, f32 acc, f32-ish out).  Bigger tiles cut weight re-stream
    # traffic K*N*(M/bm) and amortize the ~0.35us/grid-step overhead.
    bm_assume = 512

    def footprint(bn_, bk_):
        return 2 * (bm_assume * bk_ + bk_ * bn_) + bm_assume * bn_ * (4 + 2 * 4)

    while footprint(bn, bk) > 14 * 1024 * 1024 and (bn > 256 or bk > 256):
        if bk >= bn and bk > 256:
            bk //= 2
        elif bn > 256:
            bn //= 2
        else:
            break

    # v7x has 2 TensorCores: for single-M-tile (decode) calls keep >= 2 N tiles
    # so the "parallel" N grid axis gives the second core work.
    if out_features > 512 and bn >= _round_up(out_features, 128):
        bn = max(256, _round_up(_round_up(out_features, 128) // 2, 128))
    return bn, bk


def prepare_w8a8_weight(weight_i8, *, block_n=None, block_k=None):
    """One-time (weight-load-time) preparation: transpose the int8 weight to
    (K, N), pad to tile multiples, and precompute per-output-channel column
    sums (needed to fold the -128 activation shift for the asymmetric path)."""
    out_features, in_features = weight_i8.shape
    dbn, dbk = _choose_weight_blocks(out_features, in_features)
    block_n = dbn if block_n is None else block_n
    block_k = dbk if block_k is None else block_k
    n_pad = _round_up(out_features, block_n)
    k_pad = _round_up(in_features, block_k)

    w_t = weight_i8.T
    if (k_pad, n_pad) != (in_features, out_features):
        w_t = jnp.pad(w_t, ((0, k_pad - in_features), (0, n_pad - out_features)))

    w_colsum = jnp.sum(weight_i8.astype(jnp.int32), axis=1).astype(jnp.float32)
    w_colsum_row = jnp.pad(w_colsum.reshape(1, out_features),
                           ((0, 0), (0, n_pad - out_features)))

    return dict(w_t=w_t, w_colsum_row=w_colsum_row, block_n=block_n,
                block_k=block_k, n_pad=n_pad, k_pad=k_pad,
                out_features=out_features, in_features=in_features)


# ----------------------------------------------------------------------------
# Kernel A: activation quantization (tiled over M only)
# ----------------------------------------------------------------------------
def _act_quant_kernel(x_ref, inv_sq_ref, inv_ascale_ref, qoff_ref, ascale_ref,
                      xq_ref, ascale_out_ref, *, activ_quant_type, smoothquant):
    xf = x_ref[...].astype(jnp.float32)
    if smoothquant:
        xf = xf * inv_sq_ref[...]          # reciprocal precomputed -> VALU, not EUP

    tm = xf.shape[0]
    if activ_quant_type == "per_token":
        a_scale = jnp.maximum(
            jnp.max(jnp.abs(xf), axis=-1, keepdims=True) * (1.0 / 127.0),
            jnp.float32(1e-8))
        inv = 1.0 / a_scale                # one exact divide per row (cheap)
        q = jnp.clip(jnp.round(xf * inv), -127.0, 127.0)
        ascale_out_ref[...] = a_scale
    elif activ_quant_type == "per_tensor_symm":
        q = jnp.clip(jnp.round(xf * inv_ascale_ref[...]), -127.0, 127.0)
        ascale_out_ref[...] = jnp.broadcast_to(ascale_ref[...], (tm, 1))
    else:  # per_tensor_asymm: store (uint8 code - 128) so int8 MXU path applies
        q = jnp.clip(jnp.round(xf * inv_ascale_ref[...]) + qoff_ref[...],
                     -128.0, 127.0)
        ascale_out_ref[...] = jnp.broadcast_to(ascale_ref[...], (tm, 1))

    xq_ref[...] = q.astype(xq_ref.dtype)   # int8 always (v7x casts in kernel B)


# ----------------------------------------------------------------------------
# Kernel B (split path): tiled matmul + dequant epilogue
# ----------------------------------------------------------------------------
def _matmul_dequant_kernel(xq_ref, w_ref, ascale_ref, wscale_ref, bias_ref,
                           o_ref, acc_ref, *, use_int8):
    k = pl.program_id(2)
    if use_int8:
        part = lax.dot_general(xq_ref[...], w_ref[...],
                               (((1,), (0,)), ((), ())),
                               preferred_element_type=jnp.int32)
    else:
        part = lax.dot_general(xq_ref[...].astype(jnp.bfloat16),
                               w_ref[...].astype(jnp.bfloat16),
                               (((1,), (0,)), ((), ())),
                               preferred_element_type=jnp.float32)

    @pl.when(k == 0)
    def _():
        acc_ref[...] = part                # first K step: write, no zero + RMW

    @pl.when(k > 0)
    def _():
        acc_ref[...] += part

    @pl.when(k == pl.num_programs(2) - 1)
    def _():
        acc = acc_ref[...].astype(jnp.float32)
        o_ref[...] = (acc * ascale_ref[...] * wscale_ref[...]
                      + bias_ref[...]).astype(o_ref.dtype)


# ----------------------------------------------------------------------------
# Kernel B (fused path): quantize-in-kernel matmul (per-tensor activations only)
# ----------------------------------------------------------------------------
def _fused_quant_matmul_kernel(x_ref, w_ref, invq_ref, qoff_ref, dequant_ref,
                               bias_ref, o_ref, acc_ref, *, use_int8, asymm):
    k = pl.program_id(2)
    xf = x_ref[...].astype(jnp.float32) * invq_ref[...]   # 1/(sq * a_scale) row
    if asymm:
        q = jnp.clip(jnp.round(xf) + qoff_ref[...], -128.0, 127.0)
    else:
        q = jnp.clip(jnp.round(xf), -127.0, 127.0)

    if use_int8:
        part = lax.dot_general(q.astype(jnp.int8), w_ref[...],
                               (((1,), (0,)), ((), ())),
                               preferred_element_type=jnp.int32)
    else:
        part = lax.dot_general(q.astype(jnp.bfloat16),
                               w_ref[...].astype(jnp.bfloat16),
                               (((1,), (0,)), ((), ())),
                               preferred_element_type=jnp.float32)

    @pl.when(k == 0)
    def _():
        acc_ref[...] = part

    @pl.when(k > 0)
    def _():
        acc_ref[...] += part

    @pl.when(k == pl.num_programs(2) - 1)
    def _():
        acc = acc_ref[...].astype(jnp.float32)
        o_ref[...] = (acc * dequant_ref[...] + bias_ref[...]).astype(o_ref.dtype)


# ----------------------------------------------------------------------------
# Wrapper
# ----------------------------------------------------------------------------
def w8a8_linear_aiu(x, weight_i8, bias, qdata, *, weight_quant_type,
                    activ_quant_type, smoothquant, prepared=None,
                    block_m=None, block_n=None, block_k=None,
                    use_int8_mxu=None):
    """Pallas implementation of W8A8LinearAIU.forward (== fms_mo::i8i8_aiu)."""
    out_features, in_features = weight_i8.shape
    if prepared is None:
        # TODO(synk): callers should cache prepare_w8a8_weight() at weight-load
        # time; doing it per call re-reads/re-writes the whole K x N weight.
        prepared = prepare_w8a8_weight(weight_i8, block_n=block_n, block_k=block_k)
    block_n = prepared["block_n"]
    block_k = prepared["block_k"]
    n_pad = prepared["n_pad"]
    k_pad = prepared["k_pad"]
    w_t = prepared["w_t"]
    w_colsum_row = prepared["w_colsum_row"]

    orig_lead = x.shape[:-1]
    m = math.prod(orig_lead) if orig_lead else 1
    x2 = x.reshape(m, in_features)

    # ---- decompose qdata exactly like the torch buffer concatenation ----
    w_size = out_features if weight_quant_type == "per_channel" else 1
    z_size = out_features if activ_quant_type == "per_tensor_asymm" else 1
    s_size = in_features if smoothquant else 1
    idx = 0
    w_clip_val = qdata[idx:idx + w_size]; idx += w_size
    idx += w_size  # w_clip_valn unused (symmetric weight quantization contract)
    a_clip_val = qdata[idx:idx + 1]; idx += 1
    a_clip_valn = qdata[idx:idx + 1]; idx += 1
    zero_shift = qdata[idx:idx + z_size]; idx += z_size
    sq_scale = qdata[idx:idx + s_size]; idx += s_size

    per_token = activ_quant_type == "per_token"
    asymm = activ_quant_type == "per_tensor_asymm"
    if use_int8_mxu is None:
        use_int8_mxu = _int8_mxu_supported()
    use_int8 = bool(use_int8_mxu)

    # ---- activation quantization constants ----
    if activ_quant_type == "per_tensor_symm":
        a_scale_const = (a_clip_val.astype(jnp.float32) / 127.0).reshape(1, 1)
        a_zp = jnp.zeros((1, 1), jnp.float32)
    elif asymm:
        a_scale_const = ((a_clip_val - a_clip_valn).astype(jnp.float32)
                         / 255.0).reshape(1, 1)
        a_zp = jnp.round(-a_clip_valn.astype(jnp.float32).reshape(1, 1)
                         / a_scale_const)
    else:  # per_token: per-row scale computed in-kernel
        a_scale_const = jnp.ones((1, 1), jnp.float32)
        a_zp = jnp.zeros((1, 1), jnp.float32)
    inv_a_scale = 1.0 / a_scale_const
    q_offset = (a_zp - 128.0) if asymm else jnp.zeros((1, 1), jnp.float32)

    # ---- M tiling ----
    if block_m is None:
        if m <= 256:
            block_m = _round_up(max(m, 8), 8)      # single M tile (decode-sized)
        elif m <= 2048:
            block_m = 256
        else:
            block_m = 512
    m_pad = _round_up(m, block_m)

    if (m_pad, k_pad) != (m, in_features):
        x2 = jnp.pad(x2, ((0, m_pad - m), (0, k_pad - in_features)))

    # ---- inverse smoothquant row (exact reciprocal precomputed once) ----
    if smoothquant:
        inv_sq_row = jnp.pad(
            (1.0 / sq_scale.astype(jnp.float32)).reshape(1, in_features),
            ((0, 0), (0, k_pad - in_features)), constant_values=1.0)
    else:
        inv_sq_row = jnp.ones((1, k_pad), jnp.float32)

    # ---- per-output-channel rows ----
    w_scale = w_clip_val.astype(jnp.float32) / 127.0
    if weight_quant_type == "per_channel":
        w_scale_row = jnp.pad(w_scale.reshape(1, out_features),
                              ((0, 0), (0, n_pad - out_features)))
    else:
        w_scale_row = jnp.broadcast_to(w_scale.reshape(1, 1), (1, n_pad))

    if bias is None:
        bias_row = jnp.zeros((1, n_pad), jnp.float32)
    else:
        bias_row = jnp.pad(bias.astype(jnp.float32).reshape(1, out_features),
                           ((0, 0), (0, n_pad - out_features)))

    if asymm:
        zshift_row = jnp.pad(zero_shift.astype(jnp.float32).reshape(1, z_size),
                             ((0, 0), (0, n_pad - z_size)))
        # Fold the "+128*colsum(W)" un-shift (activations stored as code-128)
        # and the "-zp*zero_shift" correction into the bias row.  Valid because
        # a_scale is per-tensor on the asymmetric path.
        corr_row = 128.0 * w_colsum_row - a_zp * zshift_row
        bias_eff_row = bias_row + corr_row * a_scale_const * w_scale_row
    else:
        bias_eff_row = bias_row

    out_dtype = x.dtype
    out_bytes = jnp.dtype(out_dtype).itemsize
    x_bytes = jnp.dtype(x2.dtype).itemsize
    acc_dtype = jnp.int32 if use_int8 else jnp.float32

    m_tiles = m_pad // block_m
    n_tiles = n_pad // block_n
    k_tiles = k_pad // block_k
    grid = (m_tiles, n_tiles, k_tiles)

    def _vmem_limit(nbytes):
        return int(min(_VMEM_CAP, max(32 * 1024 * 1024, int(1.25 * nbytes))))

    # Fused path: per-tensor scale is a known constant -> no row reduction, so
    # for small N re-stream factors skip kernel A and the x_q HBM round trip.
    fuse_quant = (not per_token) and n_tiles <= 2

    if fuse_quant:
        inv_q_row = inv_sq_row * inv_a_scale                  # (1, k_pad)
        dequant_row = a_scale_const * w_scale_row             # (1, n_pad)
        fp_b = (2 * (block_m * block_k * x_bytes + block_k * block_n)
                + 2 * block_m * block_n * out_bytes
                + block_m * block_n * 4 + 8 * block_n * 4 + 4 * block_k * 4)
        cost = pl.CostEstimate(
            flops=2 * m_pad * n_pad * k_pad, transcendentals=0,
            bytes_accessed=(k_pad * n_pad * m_tiles
                            + m_pad * k_pad * x_bytes * n_tiles
                            + m_pad * n_pad * out_bytes))
        kernel = functools.partial(_fused_quant_matmul_kernel,
                                   use_int8=use_int8, asymm=asymm)
        out = pl.pallas_call(
            kernel,
            out_shape=jax.ShapeDtypeStruct((m_pad, n_pad), out_dtype),
            grid=grid,
            in_specs=[
                pl.BlockSpec((block_m, block_k), lambda i, j, k: (i, k)),   # raw x
                pl.BlockSpec((block_k, block_n), lambda i, j, k: (k, j)),   # int8 W^T
                pl.BlockSpec((1, block_k), lambda i, j, k: (0, k)),         # 1/(sq*a_scale)
                pl.BlockSpec((1, 1), lambda i, j, k: (0, 0)),               # zp - 128
                pl.BlockSpec((1, block_n), lambda i, j, k: (0, j)),         # a_scale*w_scale
                pl.BlockSpec((1, block_n), lambda i, j, k: (0, j)),         # bias (+corr)
            ],
            out_specs=pl.BlockSpec((block_m, block_n), lambda i, j, k: (i, j)),
            scratch_shapes=[pltpu.VMEM((block_m, block_n), acc_dtype)],
            compiler_params=pltpu.CompilerParams(
                dimension_semantics=("parallel", "parallel", "arbitrary"),
                vmem_limit_bytes=_vmem_limit(fp_b)),
            cost_estimate=cost,
        )(x2, w_t, inv_q_row, q_offset, dequant_row, bias_eff_row)
    else:
        # ---------------- Kernel A: quantize activations ----------------
        # Decouple kernel A's M tile from block_m and cap its VMEM working set
        # (2x input double-buffer + 2x int8 out + f32 temporaries per row).
        per_row_bytes = k_pad * (2 * x_bytes + 2 * 1 + 8)
        budget = 24 * 1024 * 1024
        cap = max(8, budget // max(per_row_bytes, 1))
        divisors = [d for d in range(8, block_m + 1, 8) if block_m % d == 0]
        fitting = [d for d in divisors if d <= cap]
        block_m_a = max(fitting) if fitting else divisors[0]
        # TODO(synk): for very large in_features, K-tile kernel A with a two-pass
        # (running row-max, then quantize) scheme instead of a tiny block_m_a.

        quant_kernel = functools.partial(_act_quant_kernel,
                                         activ_quant_type=activ_quant_type,
                                         smoothquant=smoothquant)
        fp_a = (2 * block_m_a * k_pad * (x_bytes + 1)
                + 2 * block_m_a * k_pad * 4 + 2 * k_pad * 4 + 4 * block_m_a * 4)
        x_q, a_scale_col = pl.pallas_call(
            quant_kernel,
            out_shape=(jax.ShapeDtypeStruct((m_pad, k_pad), jnp.int8),
                       jax.ShapeDtypeStruct((m_pad, 1), jnp.float32)),
            grid=(m_pad // block_m_a,),
            in_specs=[
                pl.BlockSpec((block_m_a, k_pad), lambda i: (i, 0)),   # x tile
                pl.BlockSpec((1, k_pad), lambda i: (0, 0)),           # 1/smoothquant
                pl.BlockSpec((1, 1), lambda i: (0, 0)),               # 1/a_scale
                pl.BlockSpec((1, 1), lambda i: (0, 0)),               # zp - 128
                pl.BlockSpec((1, 1), lambda i: (0, 0)),               # a_scale const
            ],
            out_specs=(pl.BlockSpec((block_m_a, k_pad), lambda i: (i, 0)),
                       pl.BlockSpec((block_m_a, 1), lambda i: (i, 0))),
            compiler_params=pltpu.CompilerParams(
                dimension_semantics=("parallel",),
                vmem_limit_bytes=_vmem_limit(fp_a)),
        )(x2, inv_sq_row, inv_a_scale, q_offset, a_scale_const)

        # ---------------- Kernel B: tiled matmul + dequant ----------------
        fp_b = (2 * (block_m * block_k + block_k * block_n)
                + 2 * block_m * block_n * out_bytes
                + block_m * block_n * 4 + 2 * block_m * 4 + 8 * block_n * 4)
        cost = pl.CostEstimate(
            flops=2 * m_pad * n_pad * k_pad, transcendentals=0,
            bytes_accessed=(k_pad * n_pad * m_tiles          # weight re-streamed per M tile
                            + m_pad * k_pad * n_tiles        # x_q re-streamed per N tile
                            + m_pad * n_pad * out_bytes))
        mm_kernel = functools.partial(_matmul_dequant_kernel, use_int8=use_int8)
        out = pl.pallas_call(
            mm_kernel,
            out_shape=jax.ShapeDtypeStruct((m_pad, n_pad), out_dtype),
            grid=grid,
            in_specs=[
                pl.BlockSpec((block_m, block_k), lambda i, j, k: (i, k)),   # int8 x_q
                pl.BlockSpec((block_k, block_n), lambda i, j, k: (k, j)),   # int8 W^T
                pl.BlockSpec((block_m, 1), lambda i, j, k: (i, 0)),         # per-row a_scale
                pl.BlockSpec((1, block_n), lambda i, j, k: (0, j)),         # w_scale
                pl.BlockSpec((1, block_n), lambda i, j, k: (0, j)),         # bias (+corr)
            ],
            out_specs=pl.BlockSpec((block_m, block_n), lambda i, j, k: (i, j)),
            scratch_shapes=[pltpu.VMEM((block_m, block_n), acc_dtype)],
            compiler_params=pltpu.CompilerParams(
                dimension_semantics=("parallel", "parallel", "arbitrary"),
                vmem_limit_bytes=_vmem_limit(fp_b)),
            cost_estimate=cost,
        )(x_q, w_t, a_scale_col, w_scale_row, bias_eff_row)

    out = out[:m, :out_features].reshape(*orig_lead, out_features)
    return out


# ----------------------------------------------------------------------------
# Pure-JAX reference (same math, for validation)
# ----------------------------------------------------------------------------
def _reference(x, weight_i8, bias, qdata, *, weight_quant_type,
               activ_quant_type, smoothquant):
    out_features, in_features = weight_i8.shape
    w_size = out_features if weight_quant_type == "per_channel" else 1
    z_size = out_features if activ_quant_type == "per_tensor_asymm" else 1
    s_size = in_features if smoothquant else 1
    idx = 0
    w_cv = qdata[idx:idx + w_size]; idx += w_size
    idx += w_size  # w_clip_valn unused (symmetric)
    a_cv = qdata[idx:idx + 1]; idx += 1
    a_cvn = qdata[idx:idx + 1]; idx += 1
    zshift = qdata[idx:idx + z_size]; idx += z_size
    sq = qdata[idx:idx + s_size]; idx += s_size

    xf = x.astype(jnp.float32)
    if smoothquant:
        xf = xf * (1.0 / sq.astype(jnp.float32))
    if activ_quant_type == "per_token":
        a_scale = jnp.maximum(
            jnp.max(jnp.abs(xf), -1, keepdims=True) * (1.0 / 127.0), 1e-8)
        zp = 0.0
        xq = jnp.clip(jnp.round(xf * (1.0 / a_scale)), -127, 127)
    elif activ_quant_type == "per_tensor_symm":
        a_scale = a_cv.astype(jnp.float32) / 127.0
        zp = 0.0
        xq = jnp.clip(jnp.round(xf * (1.0 / a_scale)), -127, 127)
    else:
        a_scale = (a_cv - a_cvn).astype(jnp.float32) / 255.0
        zp = jnp.round(-a_cvn.astype(jnp.float32) / a_scale)
        xq = jnp.clip(jnp.round(xf * (1.0 / a_scale)) + zp, 0, 255)
    acc = xq @ weight_i8.astype(jnp.float32).T
    acc = acc - zp * jnp.broadcast_to(zshift.astype(jnp.float32), (out_features,))
    w_scale = jnp.broadcast_to(w_cv.astype(jnp.float32) / 127.0, (out_features,))
    y = acc * a_scale * w_scale
    if bias is not None:
        y = y + bias.astype(jnp.float32)
    return y.astype(x.dtype)


if __name__ == "__main__":
    B, S, IN, OUT = 2, 8, 256, 256

    key = jax.random.PRNGKey(0)
    k1, k2, k3, k4, k5 = jax.random.split(key, 5)

    x = jax.random.normal(k1, (B, S, IN), jnp.float32)
    weight_i8 = jax.random.randint(k2, (OUT, IN), -127, 128, jnp.int32).astype(jnp.int8)
    bias = 0.1 * jax.random.normal(k3, (OUT,), jnp.float32)

    # Weight prepared ONCE (hoisted transpose / pad / colsum), reused across calls.
    prepared = prepare_w8a8_weight(weight_i8)

    # --- Config 1: per-channel weights, per-token activations, smoothquant ON ---
    w_clip_val = 0.02 + 0.01 * jax.random.uniform(k4, (OUT,), jnp.float32)
    w_clip_valn = -w_clip_val
    a_clip_val = jnp.zeros((1,), jnp.float32)      # per_token -> 0
    a_clip_valn = jnp.zeros((1,), jnp.float32)
    zero_shift = jnp.zeros((1,), jnp.float32)      # symmetric activations -> 0
    sq_scale = 0.5 + jax.random.uniform(k5, (IN,), jnp.float32)
    qdata1 = jnp.concatenate(
        [w_clip_val, w_clip_valn, a_clip_val, a_clip_valn, zero_shift, sq_scale]
    ).astype(jnp.float32)

    out1 = w8a8_linear_aiu(
        x, weight_i8, bias, qdata1,
        weight_quant_type="per_channel", activ_quant_type="per_token",
        smoothquant=True, prepared=prepared)
    out1 = jax.block_until_ready(out1)
    ref1 = _reference(
        x, weight_i8, bias, qdata1,
        weight_quant_type="per_channel", activ_quant_type="per_token",
        smoothquant=True)
    assert out1.shape == (B, S, OUT)
    assert jnp.allclose(out1, ref1, rtol=1e-4, atol=1e-4), "mismatch (per_token)"

    # --- Config 2: per-tensor weights, per-tensor asymmetric activations ---
    w_clip2 = jnp.array([0.025], jnp.float32)
    qdata2 = jnp.concatenate([
        w_clip2, -w_clip2,
        jnp.array([2.0], jnp.float32), jnp.array([-2.0], jnp.float32),
        jnp.sum(weight_i8.astype(jnp.float32), axis=1),   # zero_shift = colsum(W)
        jnp.ones((1,), jnp.float32),
    ]).astype(jnp.float32)

    out2 = w8a8_linear_aiu(
        x, weight_i8, bias, qdata2,
        weight_quant_type="per_tensor", activ_quant_type="per_tensor_asymm",
        smoothquant=False, prepared=prepared)
    out2 = jax.block_until_ready(out2)
    ref2 = _reference(
        x, weight_i8, bias, qdata2,
        weight_quant_type="per_tensor", activ_quant_type="per_tensor_asymm",
        smoothquant=False)
    assert out2.shape == (B, S, OUT)
    assert jnp.allclose(out2, ref2, rtol=1e-4, atol=1e-4), "mismatch (asymm)"

    print("KERNEL_OK")
</pallas_src>

<mosaic_0001>
module attributes {stable_mosaic.version = 11 : i64} {
  func.func @_act_quant_kernel(%arg0: i32, %arg1: memref<16x256xf32, #tpu.memory_space<vmem>>, %arg2: memref<1x256xf32, #tpu.memory_space<vmem>>, %arg3: memref<1x1xf32, #tpu.memory_space<vmem>>, %arg4: memref<1x1xf32, #tpu.memory_space<vmem>>, %arg5: memref<1x1xf32, #tpu.memory_space<vmem>>, %arg6: memref<16x256xi8, #tpu.memory_space<vmem>>, %arg7: memref<16x1xf32, #tpu.memory_space<vmem>>) attributes {dimension_semantics = [#tpu.dimension_semantics<parallel>], iteration_bounds = array<i64: 1>, scalar_prefetch = 0 : i64, scratch_operands = 0 : i64, tpu.core_type = #tpu.core_type<tc>, window_params = [{transform_indices = @transform_0, window_bounds = array<i64: 16, 256>}, {pipeline_mode = #tpu.pipeline_mode<synchronous>, transform_indices = @transform_1, window_bounds = array<i64: 1, 256>}, {pipeline_mode = #tpu.pipeline_mode<synchronous>, transform_indices = @transform_2, window_bounds = array<i64: 1, 1>}, {pipeline_mode = #tpu.pipeline_mode<synchronous>, transform_indices = @transform_3, window_bounds = array<i64: 1, 1>}, {pipeline_mode = #tpu.pipeline_mode<synchronous>, transform_indices = @transform_4, window_bounds = array<i64: 1, 1>}, {transform_indices = @transform_5, window_bounds = array<i64: 16, 256>}, {transform_indices = @transform_6, window_bounds = array<i64: 16, 1>}]} {
    %c0 = arith.constant 0 : index
    %c0_0 = arith.constant 0 : index
    %0 = vector.load %arg1[%c0, %c0_0] : memref<16x256xf32, #tpu.memory_space<vmem>>, vector<16x256xf32>
    %c0_1 = arith.constant 0 : index
    %c0_2 = arith.constant 0 : index
    %1 = vector.load %arg2[%c0_1, %c0_2] : memref<1x256xf32, #tpu.memory_space<vmem>>, vector<1x256xf32>
    %2 = vector.broadcast %1 : vector<1x256xf32> to vector<16x256xf32>
    %3 = arith.mulf %0, %2 : vector<16x256xf32>
    %4 = math.absf %3 : vector<16x256xf32>
    %cst = arith.constant dense<0xFF800000> : vector<16xf32>
    %5 = vector.multi_reduction <maximumf>, %4, %cst [1] : vector<16x256xf32> to vector<16xf32>
    %6 = vector.shape_cast %5 : vector<16xf32> to vector<16x1xf32>
    %cst_3 = arith.constant 0.00787401571 : f32
    %7 = vector.broadcast %cst_3 : f32 to vector<16x1xf32>
    %8 = arith.mulf %6, %7 : vector<16x1xf32>
    %cst_4 = arith.constant 9.99999993E-9 : f32
    %9 = vector.broadcast %cst_4 : f32 to vector<16x1xf32>
    %10 = arith.maximumf %8, %9 : vector<16x1xf32>
    %cst_5 = arith.constant 1.000000e+00 : f32
    %11 = vector.broadcast %cst_5 : f32 to vector<16x1xf32>
    %12 = arith.divf %11, %10 : vector<16x1xf32>
    %13 = vector.broadcast %12 : vector<16x1xf32> to vector<16x256xf32>
    %14 = arith.mulf %3, %13 : vector<16x256xf32>
    %15 = math.roundeven %14 : vector<16x256xf32>
    %cst_6 = arith.constant -1.270000e+02 : f32
    %cst_7 = arith.constant 1.270000e+02 : f32
    %16 = vector.broadcast %cst_6 : f32 to vector<16x256xf32>
    %17 = arith.maximumf %16, %15 : vector<16x256xf32>
    %18 = vector.broadcast %cst_7 : f32 to vector<16x256xf32>
    %19 = arith.minimumf %18, %17 : vector<16x256xf32>
    %c0_8 = arith.constant 0 : index
    %c0_9 = arith.constant 0 : index
    %20 = vector.load %arg7[%c0_8, %c0_9] : memref<16x1xf32, #tpu.memory_space<vmem>>, vector<16x1xf32>
    tpu.vector_store %arg7[%c0_8, %c0_9], %10 {strides = array<i32>} : memref<16x1xf32, #tpu.memory_space<vmem>>, vector<16x1xf32>,
    %21 = arith.fptosi %19 : vector<16x256xf32> to vector<16x256xi8>
    %c0_10 = arith.constant 0 : index
    %c0_11 = arith.constant 0 : index
    %22 = vector.load %arg6[%c0_10, %c0_11] : memref<16x256xi8, #tpu.memory_space<vmem>>, vector<16x256xi8>
    tpu.vector_store %arg6[%c0_10, %c0_11], %21 {strides = array<i32>} : memref<16x256xi8, #tpu.memory_space<vmem>>, vector<16x256xi8>,
    return
  }
  func.func @transform_0(%arg0: i32) -> (i32, i32) {
    %c0_i32 = arith.constant 0 : i32
    %c0_i32_0 = arith.constant 0 : i32
    return %arg0, %c0_i32 : i32, i32
  }
  func.func @transform_1(%arg0: i32) -> (i32, i32) {
    %c0_i32 = arith.constant 0 : i32
    %c0_i32_0 = arith.constant 0 : i32
    %c0_i32_1 = arith.constant 0 : i32
    return %c0_i32, %c0_i32_0 : i32, i32
  }
  func.func @transform_2(%arg0: i32) -> (i32, i32) {
    %c0_i32 = arith.constant 0 : i32
    %c0_i32_0 = arith.constant 0 : i32
    %c0_i32_1 = arith.constant 0 : i32
    return %c0_i32, %c0_i32_0 : i32, i32
  }
  func.func @transform_3(%arg0: i32) -> (i32, i32) {
    %c0_i32 = arith.constant 0 : i32
    %c0_i32_0 = arith.constant 0 : i32
    %c0_i32_1 = arith.constant 0 : i32
    return %c0_i32, %c0_i32_0 : i32, i32
  }
  func.func @transform_4(%arg0: i32) -> (i32, i32) {
    %c0_i32 = arith.constant 0 : i32
    %c0_i32_0 = arith.constant 0 : i32
    %c0_i32_1 = arith.constant 0 : i32
    return %c0_i32, %c0_i32_0 : i32, i32
  }
  func.func @transform_5(%arg0: i32) -> (i32, i32) {
    %c0_i32 = arith.constant 0 : i32
    %c0_i32_0 = arith.constant 0 : i32
    return %arg0, %c0_i32 : i32, i32
  }
  func.func @transform_6(%arg0: i32) -> (i32, i32) {
    %c0_i32 = arith.constant 0 : i32
    %c0_i32_0 = arith.constant 0 : i32
    return %arg0, %c0_i32 : i32, i32
  }
}

</mosaic_0001>

<llo_original>
// kernel: tpu_custom_call.1
$region0: #{tpu_custom_call.1}
  #allocation0 [shape = 'u32[]', space=smem, size = 0x4, offset = 0x4, fixed_abs, tag = 'smem constant byte address 0x4 - core index']
  #allocation1 [shape = 'u32[144,128]{1,0:T(1,128)}', space=vmem, size = 0x12000, scoped, tag = 'internal scratch']
  #allocation2 [shape = 'f32[1,1]{1,0:T(1,128)S(1)}', space=vmem, size = 0x200, scoped, tag = 'scoped memory for tpu_custom_call.1']
  #allocation3 [shape = 'f32[1,1]{1,0:T(1,128)S(1)}', space=vmem, size = 0x200, scoped, tag = 'scoped memory for tpu_custom_call.1']
  #allocation4 [shape = 'f32[1,1]{1,0:T(1,128)S(1)}', space=vmem, size = 0x200, scoped, tag = 'scoped memory for tpu_custom_call.1']
  %s0 = inlined_call_operand.hbm [shape: f32[16,256], index: 0, kind: input, shape index: {}]
  %s1 = inlined_call_operand.vmem [shape: f32[1,256], index: 1, kind: input, shape index: {}]
  %s2 = inlined_call_operand.<no memory space> [shape: f32[1,1], index: 2, kind: input, shape index: {}]
  %s3 = inlined_call_operand.<no memory space> [shape: f32[1,1], index: 3, kind: input, shape index: {}]
  %s4 = inlined_call_operand.<no memory space> [shape: f32[1,1], index: 4, kind: input, shape index: {}]
  %s5 = inlined_call_operand.hbm [shape: s8[16,256], index: 5, kind: output, shape index: {0}]
  %s6 = inlined_call_operand.vmem [shape: f32[16,1], index: 6, kind: output, shape index: {1}]
  %7 = xla_tuple %s5, %s6
  %s8 = sld [smem:[#allocation0]]
  $region42: #{tpu_custom_call.1} parent=0
    _
  %s10 = ssub.s32 1, %s8
  %s11 = scalar_select 0, %s10, %s8
  %v12 = vstv %s2
  %13 = vst [vmem:[#allocation2] sm:$0x1] %v12
  %v14 = vstv %s3
  %15 = vst [vmem:[#allocation3] sm:$0x1] %v14
  %v16 = vstv %s4
  %17 = vst [vmem:[#allocation4] sm:$0x1] %v16
  $region1: #{tpu_custom_call.1} parent=0
    #allocation5 [shape = 'u8[16384]{0}', space=vmem, size = 0x4000, scoped, tag = 'input window, operand 0, single buffered']
    #allocation6 [shape = 's32[1]{0}', space=sflag, size = 0x4, scoped, tag = 'scoped memory for tpu_custom_call.1']
    #allocation7 [shape = 's32[1]{0}', space=sflag, size = 0x4, scoped, tag = 'scoped memory for tpu_custom_call.1']
    #allocation8 [shape = 'u8[4096]{0}', space=vmem, size = 0x1000, scoped, tag = 'output window, operand 0, single buffered']
    %18 = vsyncpa [#allocation6], 0
    %19 = vsyncpa [#allocation7], 0
    // Predicated region
    $region2: #{tpu_custom_call.1} parent=1 // pred_check
      _
    $region3: #{tpu_custom_call.1} parent=1 // pred_check_branch
      %21 = sbr.rel (0) target = $region5
    $region4: #{tpu_custom_call.1} parent=1 // pred_region
      %s23 = ssub.s32 512, 512
      %24 = vsyncadd [#allocation6], %s23
      %s25 = sshll.u32 [#allocation5], 4
      %s26 = int_to_ptr.vmem [resolvable:$true] %s25
      %31 = dma.hbm_to_vmem [thread:$0]  %s0, 512, %s26, [#allocation6], 256, 256, 16
    $region5: #{tpu_custom_call.1} parent=1 // pred_fallthru
      _
    // Predicated region
    $region6: #{tpu_custom_call.1} parent=1 // pred_check
      _
    $region7: #{tpu_custom_call.1} parent=1 // pred_check_branch
      %33 = sbr.rel (0) target = $region9
    $region8: #{tpu_custom_call.1} parent=1 // pred_region
      _
    $region9: #{tpu_custom_call.1} parent=1 // pred_fallthru
      _
    // Predicated region
    $region10: #{tpu_custom_call.1} parent=1 // pred_check
      _
    $region11: #{tpu_custom_call.1} parent=1 // pred_check_branch
      %35 = sbr.rel (0) target = $region13
    $region12: #{tpu_custom_call.1} parent=1 // pred_region
      _
    $region13: #{tpu_custom_call.1} parent=1 // pred_fallthru
      _
    // Predicated region
    $region14: #{tpu_custom_call.1} parent=1 // pred_check
      _
    $region15: #{tpu_custom_call.1} parent=1 // pred_check_branch
      %37 = sbr.rel (0) target = $region17
    $region16: #{tpu_custom_call.1} parent=1 // pred_region
      _
    $region17: #{tpu_custom_call.1} parent=1 // pred_fallthru
      _
    // Predicated region
    $region18: #{tpu_custom_call.1} parent=1 // pred_check
      _
    $region19: #{tpu_custom_call.1} parent=1 // pred_check_branch
      %39 = sbr.rel (0) target = $region21
    $region20: #{tpu_custom_call.1} parent=1 // pred_region
      _
    $region21: #{tpu_custom_call.1} parent=1 // pred_fallthru
      _
    // Predicated region
    $region22: #{tpu_custom_call.1} parent=1 // pred_check
      _
    $region23: #{tpu_custom_call.1} parent=1 // pred_check_branch
      %41 = sbr.rel (0) target = $region25
    $region24: #{tpu_custom_call.1} parent=1 // pred_region
      %42 = dma.done [#allocation6], 512
    $region25: #{tpu_custom_call.1} parent=1 // pred_fallthru
      _
    %v43 = vld [vmem:[#allocation5] sm:$0xff]
    %v44 = vld [vmem:[#allocation5 + $0x8] sm:$0xff]
    %v45 = vld [vmem:[#allocation5 + $0x10] sm:$0xff]
    %v46 = vld [vmem:[#allocation5 + $0x18] sm:$0xff]
    %v47 = vld [vmem:[%s1] sm:$0x3]
    %v49 = vlaneseq
    %v50 = vshrl.u32 %v49, 7
    %v51 = vsub.s32 0, %v50
    %v52 = vrot.slane %v47, %v51
    %v53 = vlaneseq
    %v54 = vshrl.u32 %v53, 7
    %v55 = vsub.s32 1, %v54
    %v56 = vrot.slane %v47, %v55
    %v59 = vmul.f32 %v43, %v52
    %v60 = vmul.f32 %v44, %v56
    %v61 = vmul.f32 %v45, %v52
    %v62 = vmul.f32 %v46, %v56
    %v63 = vand.u32 2147483647, %v59
    %v64 = vand.u32 2147483647, %v60
    %v65 = vand.u32 2147483647, %v61
    %v66 = vand.u32 2147483647, %v62
    %v67 = vmax.f32 %v63, %v64
    %68 = vmax.xlane.f32.xlu0 %v67
    %v69 = vpop.xlane.xlu0 %68
    %v70 = vmax.f32 %v65, %v66
    %71 = vmax.xlane.f32.xlu0 %v70
    %v72 = vpop.xlane.xlu0 %71
    %v73 = vmul.f32 %v69, 0.007874016
    %v74 = vmul.f32 %v72, 0.007874016
    %v75 = vmax.f32 %v73, 1e-08
    %v76 = vmax.f32 %v74, 1e-08
    %v77 = vrcp.pop %v75
    %v78 = vmul.f32 1.0, %v77
    %v79 = vrcp.pop %v76
    %v80 = vmul.f32 1.0, %v79
    %v81 = vmul.f32 %v59, %v78
    %v82 = vmul.f32 %v60, %v78
    %v83 = vmul.f32 %v61, %v80
    %v84 = vmul.f32 %v62, %v80
    %v85 = vround.ne.pseudo %v81
    %v86 = vround.ne.pseudo %v82
    %v87 = vround.ne.pseudo %v83
    %v88 = vround.ne.pseudo %v84
    %v89 = vmax.f32 %v85, -127.0
    %v90 = vmax.f32 %v86, -127.0
    %v91 = vmax.f32 %v87, -127.0
    %v92 = vmax.f32 %v88, -127.0
    %v93 = vmin.f32 %v89, 127.0
    %v94 = vmin.f32 %v90, 127.0
    %v95 = vmin.f32 %v91, 127.0
    %v96 = vmin.f32 %v92, 127.0
    %vm97 = vcmask 7168
    %98 = vst.msk [vmem:[%s6] sm:$0xff] %vm97, %v75
    %99 = vst.msk [vmem:[%s6 + $0x8] sm:$0xff] %vm97, %v76
    %v100 = vmax.f32 %v93, -128.0
    %v101 = vmax.f32 %v94, -128.0
    %v102 = vmax.f32 %v95, -128.0
    %v103 = vmax.f32 %v96, -128.0
    %v104 = vmin.f32 %v100, 127.0
    %v105 = vmin.f32 %v101, 127.0
    %v106 = vmin.f32 %v102, 127.0
    %v107 = vmin.f32 %v103, 127.0
    %v108 = vcvt.f32.s32.to.zero.pseudo %v104
    %v109 = vcvt.f32.s32.to.zero.pseudo %v105
    %v110 = vcvt.f32.s32.to.zero.pseudo %v106
    %v111 = vcvt.f32.s32.to.zero.pseudo %v107
    %v112 = vpack.c.b16 %v109, %v108
    %v113 = vpack.c.b8 %v112, %v112
    %v114 = vpack.c.b16 %v111, %v110
    %v115 = vpack.c.b8 %v114, %v114
    %116 = vst [vmem:[#allocation8] sm:$0xf] %v113
    %117 = vst [vmem:[#allocation8 + $0x4] sm:$0xf] %v115
    // Predicated region
    $region26: #{tpu_custom_call.1} parent=1 // pred_check
      _
    $region27: #{tpu_custom_call.1} parent=1 // pred_check_branch
      %119 = sbr.rel (0) target = $region29
    $region28: #{tpu_custom_call.1} parent=1 // pred_region
      %s121 = ssub.s32 128, 128
      %122 = vsyncadd [#allocation7], %s121
      %s123 = sshll.u32 [#allocation8], 4
      %s124 = int_to_ptr.vmem [resolvable:$true] %s123
      %129 = dma.vmem_to_hbm [thread:$0]  %s124, 128, %s5, [#allocation7], 64, 64, 4
    $region29: #{tpu_custom_call.1} parent=1 // pred_fallthru
      _
    // Predicated region
    $region30: #{tpu_custom_call.1} parent=1 // pred_check
      _
    $region31: #{tpu_custom_call.1} parent=1 // pred_check_branch
      %131 = sbr.rel (0) target = $region33
    $region32: #{tpu_custom_call.1} parent=1 // pred_region
      _
    $region33: #{tpu_custom_call.1} parent=1 // pred_fallthru
      _
    // Predicated region
    $region34: #{tpu_custom_call.1} parent=1 // pred_check
      _
    $region35: #{tpu_custom_call.1} parent=1 // pred_check_branch
      %133 = sbr.rel (0) target = $region37
    $region36: #{tpu_custom_call.1} parent=1 // pred_region
      %134 = dma.done [#allocation7], 128
    $region37: #{tpu_custom_call.1} parent=1 // pred_fallthru
      _
    // Predicated region
    $region38: #{tpu_custom_call.1} parent=1 // pred_check
      _
    $region39: #{tpu_custom_call.1} parent=1 // pred_check_branch
      %136 = sbr.rel (0) target = $region41
    $region40: #{tpu_custom_call.1} parent=1 // pred_region
      _
    $region41: #{tpu_custom_call.1} parent=1 // pred_fallthru
      _
    %137 = vsyncpa [#allocation6], 1
    %138 = vsyncpa [#allocation7], 1

</llo_original>
